<compile_context>
chip_gen: v5e
topology: v5e:2x2
jax: 0.10.0
libtpu: 0.0.40
codegen_flags: <defaults>
</compile_context>

<pallas_src>
import functools
import math

import jax
import jax.numpy as jnp
from jax.experimental import pallas as pl
from jax.experimental.pallas import tpu as pltpu


def _drop_path_kernel(x_ref, u_ref, o_ref, *, keep_prob, inv_keep):
    """x_ref: data tile; u_ref: per-sample uniform(s), broadcastable to x tile."""
    u = u_ref[...]                                   # f32, (1,1,1) or (TB,1)
    keep = jnp.floor(keep_prob + u)                  # 0.0 or 1.0 per sample (VPU)
    scale = keep * inv_keep                          # 0 or 1/keep_prob, f32
    o_ref[...] = (x_ref[...].astype(jnp.float32) * scale).astype(o_ref.dtype)


def _xla_drop_path(x, u, keep_prob, inv_keep):
    """Plain fused-XLA path for tiny / pathological shapes."""
    mask = jnp.floor(keep_prob + u).astype(jnp.float32)
    scale = (mask * inv_keep).reshape((x.shape[0],) + (1,) * (x.ndim - 1))
    return (x.astype(jnp.float32) * scale).astype(x.dtype)


def drop_path_pallas(x, drop_prob, key, *, training=True,
                     block_bytes=4 * 1024 * 1024,
                     xla_fallback_bytes=128 * 1024,
                     donate_x=False):
    """Stochastic-depth forward.  x: (B, ...) -> same shape."""
    if drop_prob is None or float(drop_prob) == 0.0 or not training:
        return x                                     # identity, same as PyTorch
    drop_prob = float(drop_prob)
    keep_prob = 1.0 - drop_prob
    if keep_prob <= 0.0:
        # Every path dropped; raw formula would produce NaN (x/0 * 0).
        return jnp.zeros_like(x)

    B = x.shape[0]
    L = math.prod(x.shape[1:])
    if B == 0 or L == 0:
        return x

    inv_keep = 1.0 / keep_prob
    # Per-sample uniforms (B scalars) -- only wrapper-side randomness; the
    # floor/scale math is fused into the kernel.
    u = jax.random.uniform(key, (B,), dtype=jnp.float32)

    itemsize = jnp.dtype(x.dtype).itemsize
    total_bytes = B * L * itemsize

    # Tiny tensors: Pallas launch + per-step overhead dominates; let XLA fuse.
    if total_bytes <= xla_fallback_bytes:
        return _xla_drop_path(x, u, keep_prob, inv_keep)

    kernel = functools.partial(_drop_path_kernel,
                               keep_prob=keep_prob, inv_keep=inv_keep)
    block_elems = max(1024, block_bytes // itemsize)

    if L % 128 == 0:
        # ---- lane-major per-sample slab: x -> (B, R, LL) -------------------
        nl = L // 128
        g = 1
        for cand in (16, 8, 4, 2):                   # LL up to 2048 lanes
            if nl % cand == 0 and nl // cand >= 8:   # keep >= 8 sublane rows
                g = cand
                break
        LL = 128 * g
        R = L // LL
        x_view = x.reshape(B, R, LL)
        u_in = u.reshape(B, 1, 1)

        tr_cap = max(8, (block_elems // LL) // 8 * 8)
        TR = R if R <= tr_cap else tr_cap
        # v7x: guarantee >= 2 grid steps so both TensorCores get work.
        if B == 1 and TR == R and R >= 16:
            TR = (((R + 1) // 2) + 7) // 8 * 8
        grid = (B, pl.cdiv(R, TR))
        in_specs = [
            pl.BlockSpec((1, TR, LL), lambda b, r: (b, r, 0)),   # data tile
            pl.BlockSpec((1, 1, 1), lambda b, r: (b, 0, 0)),     # per-sample u
        ]
        out_spec = pl.BlockSpec((1, TR, LL), lambda b, r: (b, r, 0))
        out_shape = jax.ShapeDtypeStruct((B, R, LL), x.dtype)
    else:
        # ---- generic 2-D layout for non-128-aligned rows -------------------
        x_view = x.reshape(B, L)
        u_in = u.reshape(B, 1)
        TB = B if B < 16 else 8
        if TB * L * itemsize > 16 * 1024 * 1024:
            # Huge non-128-aligned row: not worth a custom kernel.
            return _xla_drop_path(x, u, keep_prob, inv_keep)
        grid = (pl.cdiv(B, TB), 1)
        in_specs = [
            pl.BlockSpec((TB, L), lambda i, j: (i, j)),
            pl.BlockSpec((TB, 1), lambda i, j: (i, 0)),
        ]
        out_spec = pl.BlockSpec((TB, L), lambda i, j: (i, j))
        out_shape = jax.ShapeDtypeStruct((B, L), x.dtype)

    out = pl.pallas_call(
        kernel,
        out_shape=out_shape,
        grid_spec=pltpu.PrefetchScalarGridSpec(
            num_scalar_prefetch=0,
            grid=grid,
            in_specs=in_specs,
            out_specs=out_spec,
        ),
        compiler_params=pltpu.CompilerParams(
            dimension_semantics=("parallel", "parallel"),
            vmem_limit_bytes=48 * 1024 * 1024,
        ),
        cost_estimate=pl.CostEstimate(
            flops=2 * B * L,
            transcendentals=0,
            bytes_accessed=2 * B * L * itemsize + B * 4,
        ),
        # Only alias when the caller guarantees x is dead after this call.
        input_output_aliases={0: 0} if donate_x else {},
    )(x_view, u_in)

    return out.reshape(x.shape)


def drop_path_reference(x, drop_prob, key, *, training=True):
    """Pure-JAX reference mirroring the PyTorch forward pass."""
    if drop_prob is None or float(drop_prob) == 0.0 or not training:
        return x
    keep_prob = 1.0 - float(drop_prob)
    if keep_prob <= 0.0:
        return jnp.zeros_like(x)
    u = jax.random.uniform(key, (x.shape[0],), dtype=jnp.float32)
    random_tensor = jnp.floor(keep_prob + u).astype(x.dtype)
    random_tensor = random_tensor.reshape((x.shape[0],) + (1,) * (x.ndim - 1))
    return (x / keep_prob) * random_tensor


if __name__ == "__main__":
    key = jax.random.PRNGKey(0)
    kx, kmask, kx2, kmask2, kx3, kmask3 = jax.random.split(key, 6)

    # --- main test: (B, C, H, W) = (2, 4, 16, 16), slab kernel path ---------
    x = jax.random.normal(kx, (2, 4, 16, 16), dtype=jnp.float32)
    drop_prob = 0.3
    out = drop_path_pallas(x, drop_prob, kmask, training=True,
                           xla_fallback_bytes=0)           # force kernel path
    out = jax.block_until_ready(out)
    ref = drop_path_reference(x, drop_prob, kmask, training=True)
    assert out.shape == x.shape
    assert jnp.allclose(out, ref, atol=1e-6, rtol=1e-5), "mismatch (slab f32)"

    # --- bf16 input: f32 compute inside kernel, cast only the output --------
    x_bf = x.astype(jnp.bfloat16)
    out_bf = drop_path_pallas(x_bf, drop_prob, kmask, training=True,
                              xla_fallback_bytes=0)
    out_bf = jax.block_until_ready(out_bf)
    ref_bf = drop_path_reference(x_bf, drop_prob, kmask, training=True)
    assert jnp.allclose(out_bf.astype(jnp.float32), ref_bf.astype(jnp.float32),
                        atol=5e-2, rtol=5e-2), "mismatch (slab bf16)"

    # --- odd, non-128-aligned shape: generic 2-D kernel path ----------------
    x_odd = jax.random.normal(kx2, (3, 5, 7), dtype=jnp.float32)
    out_odd = drop_path_pallas(x_odd, 0.5, kmask2, training=True,
                               xla_fallback_bytes=0)
    out_odd = jax.block_until_ready(out_odd)
    ref_odd = drop_path_reference(x_odd, 0.5, kmask2, training=True)
    assert jnp.allclose(out_odd, ref_odd, atol=1e-6, rtol=1e-5), "mismatch (odd)"

    # --- medium tensor through default settings (kernel, multi-step grid) ---
    x_med = jax.random.normal(kx3, (8, 64, 512), dtype=jnp.float32)
    out_med = drop_path_pallas(x_med, 0.2, kmask3, training=True)
    out_med = jax.block_until_ready(out_med)
    ref_med = drop_path_reference(x_med, 0.2, kmask3, training=True)
    assert jnp.allclose(out_med, ref_med, atol=1e-6, rtol=1e-5), "mismatch (medium)"

    # --- tiny-tensor XLA fallback path (default threshold) matches too ------
    out_fb = drop_path_pallas(x, drop_prob, kmask, training=True)
    assert jnp.allclose(out_fb, ref, atol=1e-6, rtol=1e-5), "mismatch (fallback)"

    # --- identity paths: eval mode and drop_prob == 0 -----------------------
    assert jnp.array_equal(drop_path_pallas(x, drop_prob, kmask, training=False), x)
    assert jnp.array_equal(drop_path_pallas(x, 0.0, kmask, training=True), x)

    # --- drop_prob == 1.0 guard: all paths dropped -> zeros -----------------
    out_one = drop_path_pallas(x, 1.0, kmask, training=True)
    assert jnp.array_equal(out_one, jnp.zeros_like(x))

    print("KERNEL_OK")
</pallas_src>

<mosaic_0001>
module attributes {stable_mosaic.version = 11 : i64} {
  func.func @_drop_path_kernel(%arg0: i32, %arg1: i32, %arg2: memref<1x8x128xf32, #tpu.memory_space<vmem>>, %arg3: memref<1x1x1xf32, #tpu.memory_space<vmem>>, %arg4: memref<1x8x128xf32, #tpu.memory_space<vmem>>) attributes {dimension_semantics = [#tpu.dimension_semantics<parallel>, #tpu.dimension_semantics<parallel>], iteration_bounds = array<i64: 2, 1>, scalar_prefetch = 0 : i64, scratch_operands = 0 : i64, tpu.core_type = #tpu.core_type<tc>, window_params = [{transform_indices = @transform_0, window_bounds = array<i64: 1, 8, 128>}, {transform_indices = @transform_1, window_bounds = array<i64: 1, 1, 1>}, {transform_indices = @transform_2, window_bounds = array<i64: 1, 8, 128>}]} {
    %c0 = arith.constant 0 : index
    %c0_0 = arith.constant 0 : index
    %c0_1 = arith.constant 0 : index
    %0 = vector.load %arg3[%c0, %c0_0, %c0_1] : memref<1x1x1xf32, #tpu.memory_space<vmem>>, vector<1x1x1xf32>
    %cst = arith.constant 0.699999988 : f32
    %1 = vector.broadcast %cst : f32 to vector<1x1x1xf32>
    %2 = arith.addf %1, %0 : vector<1x1x1xf32>
    %3 = math.floor %2 : vector<1x1x1xf32>
    %cst_2 = arith.constant 1.42857146 : f32
    %4 = vector.broadcast %cst_2 : f32 to vector<1x1x1xf32>
    %5 = arith.mulf %3, %4 : vector<1x1x1xf32>
    %c0_3 = arith.constant 0 : index
    %c0_4 = arith.constant 0 : index
    %c0_5 = arith.constant 0 : index
    %6 = vector.load %arg2[%c0_3, %c0_4, %c0_5] : memref<1x8x128xf32, #tpu.memory_space<vmem>>, vector<1x8x128xf32>
    %7 = vector.broadcast %5 : vector<1x1x1xf32> to vector<1x8x128xf32>
    %8 = arith.mulf %6, %7 : vector<1x8x128xf32>
    %c0_6 = arith.constant 0 : index
    %c0_7 = arith.constant 0 : index
    %c0_8 = arith.constant 0 : index
    %9 = vector.load %arg4[%c0_6, %c0_7, %c0_8] : memref<1x8x128xf32, #tpu.memory_space<vmem>>, vector<1x8x128xf32>
    tpu.vector_store %arg4[%c0_6, %c0_7, %c0_8], %8 {strides = array<i32>} : memref<1x8x128xf32, #tpu.memory_space<vmem>>, vector<1x8x128xf32>,
    return
  }
  func.func @transform_0(%arg0: i32, %arg1: i32) -> (i32, i32, i32) {
    %c0_i32 = arith.constant 0 : i32
    %c0_i32_0 = arith.constant 0 : i32
    return %arg0, %arg1, %c0_i32 : i32, i32, i32
  }
  func.func @transform_1(%arg0: i32, %arg1: i32) -> (i32, i32, i32) {
    %c0_i32 = arith.constant 0 : i32
    %c0_i32_0 = arith.constant 0 : i32
    %c0_i32_1 = arith.constant 0 : i32
    return %arg0, %c0_i32, %c0_i32_0 : i32, i32, i32
  }
  func.func @transform_2(%arg0: i32, %arg1: i32) -> (i32, i32, i32) {
    %c0_i32 = arith.constant 0 : i32
    %c0_i32_0 = arith.constant 0 : i32
    return %arg0, %arg1, %c0_i32 : i32, i32, i32
  }
}

</mosaic_0001>

<llo_original>
// kernel: tpu_custom_call.1
$region0: #{tpu_custom_call.1}
  #allocation0 [shape = 'u32[]', space=smem, size = 0x4, offset = 0x4, fixed_abs, tag = 'smem constant byte address 0x4 - core index']
  #allocation1 [shape = 'u32[72,128]{1,0:T(1,128)}', space=vmem, size = 0x9000, scoped, tag = 'internal scratch']
  %s0 = inlined_call_operand.hbm [shape: f32[2,8,128], index: 0, kind: input, shape index: {}]
  %s1 = inlined_call_operand.vmem [shape: f32[2,1,1], index: 1, kind: input, shape index: {}]
  %s2 = inlined_call_operand.hbm [shape: f32[2,8,128], index: 2, kind: output, shape index: {}]
  %s3 = sld [smem:[#allocation0]]
  $region45: #{tpu_custom_call.1} parent=0
    _
  %s5 = ssub.s32 1, %s3
  %s6 = scalar_select 0, %s5, %s3
  $region1: #{tpu_custom_call.1} parent=0
    #allocation2 [shape = 'u8[8192]{0}', space=vmem, size = 0x2000, scoped, tag = 'input window, operand 0']
    #allocation3 [shape = 's32[2]{0}', space=sflag, size = 0x8, scoped, tag = 'scoped memory for tpu_custom_call.1']
    #allocation4 [shape = 's32[2]{0}', space=sflag, size = 0x8, scoped, tag = 'scoped memory for tpu_custom_call.1']
    #allocation5 [shape = 'u8[8192]{0}', space=vmem, size = 0x2000, scoped, tag = 'output window, operand 0']
    %7 = vsyncpa [#allocation3], 0
    %s8 = scalar_lea.sflag [#allocation3], 1
    %9 = vsyncpa %s8, 0
    %10 = vsyncpa [#allocation4], 0
    %s11 = scalar_lea.sflag [#allocation4], 1
    %12 = vsyncpa %s11, 0
    loop: start=0, step=1, limit=4
    $region2: #{tpu_custom_call.1} parent=1 // loop_pre_header
      _
    $region3: #{tpu_custom_call.1} parent=1 // loop_header
      %s14 = sphi 0, %s18
      %p15 = scmp.ge.s32.totalorder %s14, 4
      %s21 = sphi 0, %s33
      %s22 = sphi 0, %s29
      %s23 = sphi 0, %s21
      %s24 = sphi 0, %s22
      %s25 = sphi 0, %s23
      %s26 = sphi 0, %s24
      %s38 = sphi 0, %s40
      %s41 = sphi 0, %s38
      %s42 = sphi 0, %s41
      %s58 = sphi 0, %s42
      %s64 = sphi 0, %s66
      %s67 = sphi 0, %s64
      %s68 = sphi 0, %s67
      %s84 = sphi 0, %s68
      %s92 = sphi 0, %s94
      %s95 = sphi 0, %s92
      %s96 = sphi 0, %s95
      %s112 = sphi 0, %s96
    $region4: #{tpu_custom_call.1} parent=1 // loop_header_branch
      %17 = sbr.rel (%p15) target = $region8
    $region5: #{tpu_custom_call.1} parent=1 // loop_body
      %s19 = ssub.s32 %s14, 1
      %s20 = ssub.s32 %s14, 2
      %s27 = sadd.s32 1, %s22
      %p28 = scmp.ge.s32.totalorder %s27, 1
      %s29 = scalar_select %p28, 0, %s27
      %s30 = sadd.s32 1, %s21
      %s31 = scalar_select %p28, %s30, %s21
      %p32 = scmp.ge.s32.totalorder %s31, 2
      %s33 = scalar_select %p32, 0, %s31
      %s34 = ssub.s32 %s21, %s33
      %s35 = ssub.s32 %s22, %s29
      %s36 = sor.u32 %s34, %s35
      %p37 = scmp.eq.s32.totalorder %s36, 0
      %s39 = sadd.s32 %s38, 1
      %s40 = scalar_select %p37, %s38, %s39
      %p43 = pneg %p37
      %p44 = scmp.eq.s32.totalorder %s14, 1
      %p45 = por %p43, %p44
      %p46 = scmp.ne.s32.totalorder %s38, %s41
      %p47 = scmp.eq.s32.totalorder %s14, 0
      %p48 = por %p46, %p47
      %p49 = scmp.ne.s32.totalorder %s38, %s41
      %p50 = scmp.eq.s32.totalorder %s19, 1
      %p51 = por %p49, %p50
      %p52 = scmp.ne.s32.totalorder %s41, %s42
      %p53 = scmp.eq.s32.totalorder %s19, 0
      %p54 = por %p52, %p53
      %p55 = scmp.ne.s32.totalorder %s41, %s42
      %p56 = scmp.eq.s32.totalorder %s20, 1
      %p57 = por %p55, %p56
      %p59 = scmp.ne.s32.totalorder %s42, %s58
      %p60 = scmp.eq.s32.totalorder %s20, 0
      %p61 = por %p59, %p60
      %s62 = ssub.s32 %s21, %s33
      %p63 = scmp.eq.s32.totalorder %s62, 0
      %s65 = sadd.s32 %s64, 1
      %s66 = scalar_select %p63, %s64, %s65
      %p69 = pneg %p63
      %p70 = scmp.eq.s32.totalorder %s14, 1
      %p71 = por %p69, %p70
      %p72 = scmp.ne.s32.totalorder %s64, %s67
      %p73 = scmp.eq.s32.totalorder %s14, 0
      %p74 = por %p72, %p73
      %p75 = scmp.ne.s32.totalorder %s64, %s67
      %p76 = scmp.eq.s32.totalorder %s19, 1
      %p77 = por %p75, %p76
      %p78 = scmp.ne.s32.totalorder %s67, %s68
      %p79 = scmp.eq.s32.totalorder %s19, 0
      %p80 = por %p78, %p79
      %p81 = scmp.ne.s32.totalorder %s67, %s68
      %p82 = scmp.eq.s32.totalorder %s20, 1
      %p83 = por %p81, %p82
      %p85 = scmp.ne.s32.totalorder %s68, %s84
      %p86 = scmp.eq.s32.totalorder %s20, 0
      %p87 = por %p85, %p86
      %s88 = ssub.s32 %s21, %s33
      %s89 = ssub.s32 %s22, %s29
      %s90 = sor.u32 %s88, %s89
      %p91 = scmp.eq.s32.totalorder %s90, 0
      %s93 = sadd.s32 %s92, 1
      %s94 = scalar_select %p91, %s92, %s93
      %p97 = pneg %p91
      %p98 = scmp.eq.s32.totalorder %s14, 1
      %p99 = por %p97, %p98
      %p100 = scmp.ne.s32.totalorder %s92, %s95
      %p101 = scmp.eq.s32.totalorder %s14, 0
      %p102 = por %p100, %p101
      %p103 = scmp.ne.s32.totalorder %s92, %s95
      %p104 = scmp.eq.s32.totalorder %s19, 1
      %p105 = por %p103, %p104
      %p106 = scmp.ne.s32.totalorder %s95, %s96
      %p107 = scmp.eq.s32.totalorder %s19, 0
      %p108 = por %p106, %p107
      %p109 = scmp.ne.s32.totalorder %s95, %s96
      %p110 = scmp.eq.s32.totalorder %s20, 1
      %p111 = por %p109, %p110
      %p113 = scmp.ne.s32.totalorder %s96, %s112
      %p114 = scmp.eq.s32.totalorder %s20, 0
      %p115 = por %p113, %p114
      %p116 = scmp.le.s32.totalorder 1, %s14
      %p117 = scmp.lt.s32.totalorder %s14, 3
      %p118 = pnand %p116, %p117
      %p119 = pneg %p118
      // Predicated region
      $region9: #{tpu_custom_call.1} parent=5 // pred_check
        _
      $region10: #{tpu_custom_call.1} parent=5 // pred_check_branch
        %121 = sbr.rel (%p118) target = $region12
      $region11: #{tpu_custom_call.1} parent=5 // pred_region
        %s122 = ssub.s32 %s14, 1
      $region12: #{tpu_custom_call.1} parent=5 // pred_fallthru
        _
      %p123 = scmp.lt.s32.totalorder %s14, 2
      // Predicated region
      $region13: #{tpu_custom_call.1} parent=5 // pred_check
        %p124 = pneg %p123
      $region14: #{tpu_custom_call.1} parent=5 // pred_check_branch
        %126 = sbr.rel (%p124) target = $region16
      $region15: #{tpu_custom_call.1} parent=5 // pred_region
        // Predicated region
        $region17: #{tpu_custom_call.1} parent=15 // pred_check
          %p127 = pneg %p48
        $region18: #{tpu_custom_call.1} parent=15 // pred_check_branch
          %129 = sbr.rel (%p127) target = $region20
        $region19: #{tpu_custom_call.1} parent=15 // pred_region
          %s130 = sand.u32 %s38, 1
          %s131 = scalar_lea.sflag [#allocation3], %s130
          %s132 = sand.u32 %s38, 1
          %s133 = smul.addr %s132, 8
          %s134 = scalar_lea.vmem [#allocation2], %s133
          %136 = vsyncadd %s131, 0
          %s137 = sadd.s32 %s22, %s21
          %s138 = smul.addr %s137, 8
          %s139 = scalar_lea.hbm %s0, %s138
          %s141 = sshll.u32 %s139, 4
          %s142 = int_to_ptr.hbm [resolvable:$true] %s141
          %s143 = sshll.u32 %s134, 4
          %s144 = int_to_ptr.vmem [resolvable:$true] %s143
          %146 = dma.hbm_to_vmem [thread:$0]  %s142, 128, %s144, %s131
        $region20: #{tpu_custom_call.1} parent=15 // pred_fallthru
          _
        // Predicated region
        $region21: #{tpu_custom_call.1} parent=15 // pred_check
          %p147 = pneg %p74
        $region22: #{tpu_custom_call.1} parent=15 // pred_check_branch
          %149 = sbr.rel (%p147) target = $region24
        $region23: #{tpu_custom_call.1} parent=15 // pred_region
          %p150 = scmp.lt.s32.totalorder %s21, 1
          %s151 = scalar_select %p150, %s21, 1
          %s152 = scalar_lea.vmem %s1, %s151
        $region24: #{tpu_custom_call.1} parent=15 // pred_fallthru
          _
      $region16: #{tpu_custom_call.1} parent=5 // pred_fallthru
        _
      %p153 = scmp.le.s32.totalorder 1, %s14
      %p154 = scmp.lt.s32.totalorder %s14, 3
      %p155 = pnand %p153, %p154
      %p156 = pneg %p155
      // Predicated region
      $region25: #{tpu_custom_call.1} parent=5 // pred_check
        _
      $region26: #{tpu_custom_call.1} parent=5 // pred_check_branch
        %158 = sbr.rel (%p155) target = $region28
      $region27: #{tpu_custom_call.1} parent=5 // pred_region
        %s159 = ssub.s32 %s14, 1
        %s160 = sand.u32 %s41, 1
        %s161 = scalar_lea.sflag [#allocation3], %s160
        %s162 = sand.u32 %s41, 1
        %s163 = smul.addr %s162, 8
        %s164 = scalar_lea.vmem [#allocation2], %s163
        // Predicated region
        $region29: #{tpu_custom_call.1} parent=27 // pred_check
          %p165 = pneg %p54
        $region30: #{tpu_custom_call.1} parent=27 // pred_check_branch
          %167 = sbr.rel (%p165) target = $region32
        $region31: #{tpu_custom_call.1} parent=27 // pred_region
          %169 = dma.done %s161, 128
        $region32: #{tpu_custom_call.1} parent=27 // pred_fallthru
          _
        %s170 = sand.u32 %s41, 1
        %s171 = scalar_lea.sflag [#allocation3], %s170
        %s172 = sand.u32 %s41, 1
        %s173 = smul.addr %s172, 8
        %s174 = scalar_lea.vmem [#allocation2], %s173
        %p175 = pneg %p54
        %p176 = pneg %p51
        %p177 = scmp.lt.s32.totalorder %s23, 1
        %s178 = scalar_select %p177, %s23, 1
        %s179 = scalar_lea.vmem %s1, %s178
        %p180 = pneg %p80
        %p181 = pneg %p77
        %p182 = pneg %p108
        %p183 = pneg %p105
        %s184 = sand.u32 %s95, 1
        %s185 = scalar_lea.sflag [#allocation4], %s184
        %s186 = sand.u32 %s95, 1
        %s187 = smul.addr %s186, 8
        %s188 = scalar_lea.vmem [#allocation5], %s187
        %p189 = scmp.lt.s32.totalorder %s23, 1
        %s190 = scalar_select %p189, %s23, 1
        %s191 = scalar_lea.vmem %s1, %s190
        %v192 = vld [vmem:[%s191] sm:$0x1]
        %v193 = vadd.f32 %v192, 0.7
        %v194 = vfloor.f32 %v193
        %v195 = vmul.f32 %v194, 1.4285715
        %v196 = vld [vmem:[%s164] sm:$0xff]
        %v198 = vperm.slane %v195, 0
        %199 = vset.pattern.permute.xlu0 0
        %200 = vperm.xlu0 %199, %v198
        %v201 = vpop.permute.xlu0 %200
        %v203 = vmul.f32 %v196, %v201
        %204 = vst [vmem:[%s188] sm:$0xff] %v203
        %s205 = sand.u32 %s95, 1
        %s206 = scalar_lea.sflag [#allocation4], %s205
        %s207 = sand.u32 %s95, 1
        %s208 = smul.addr %s207, 8
        %s209 = scalar_lea.vmem [#allocation5], %s208
        // Predicated region
        $region33: #{tpu_custom_call.1} parent=27 // pred_check
          %p210 = pneg %p105
        $region34: #{tpu_custom_call.1} parent=27 // pred_check_branch
          %212 = sbr.rel (%p210) target = $region36
        $region35: #{tpu_custom_call.1} parent=27 // pred_region
          %214 = vsyncadd %s206, 0
          %s215 = sadd.s32 %s24, %s23
          %s216 = smul.addr %s215, 8
          %s217 = scalar_lea.hbm %s2, %s216
          %s219 = sshll.u32 %s209, 4
          %s220 = int_to_ptr.vmem [resolvable:$true] %s219
          %s221 = sshll.u32 %s217, 4
          %s222 = int_to_ptr.hbm [resolvable:$true] %s221
          %224 = dma.vmem_to_hbm [thread:$0]  %s220, 128, %s222, %s206
        $region36: #{tpu_custom_call.1} parent=27 // pred_fallthru
          _
      $region28: #{tpu_custom_call.1} parent=5 // pred_fallthru
        _
      %p225 = scmp.le.s32.totalorder 2, %s14
      // Predicated region
      $region37: #{tpu_custom_call.1} parent=5 // pred_check
        %p226 = pneg %p225
      $region38: #{tpu_custom_call.1} parent=5 // pred_check_branch
        %228 = sbr.rel (%p226) target = $region40
      $region39: #{tpu_custom_call.1} parent=5 // pred_region
        %s229 = ssub.s32 %s14, 2
        // Predicated region
        $region41: #{tpu_custom_call.1} parent=39 // pred_check
          %p230 = pneg %p111
        $region42: #{tpu_custom_call.1} parent=39 // pred_check_branch
          %232 = sbr.rel (%p230) target = $region44
        $region43: #{tpu_custom_call.1} parent=39 // pred_region
          %s233 = sand.u32 %s96, 1
          %s234 = scalar_lea.sflag [#allocation4], %s233
          %s235 = sand.u32 %s96, 1
          %s236 = smul.addr %s235, 8
          %s237 = scalar_lea.vmem [#allocation5], %s236
          %239 = dma.done %s234, 128
        $region44: #{tpu_custom_call.1} parent=39 // pred_fallthru
          _
      $region40: #{tpu_custom_call.1} parent=5 // pred_fallthru
        _
    $region6: #{tpu_custom_call.1} parent=1 // loop_footer
      %s18 = sadd.s32 1, %s14
    $region7: #{tpu_custom_call.1} parent=1 // loop_footer_branch
      %13 = sbr.rel target = $region3
    $region8: #{tpu_custom_call.1} parent=1 // loop_exit
      _
    %240 = vsyncpa [#allocation3], 1
    %s241 = scalar_lea.sflag [#allocation3], 1
    %242 = vsyncpa %s241, 1
    %243 = vsyncpa [#allocation4], 1
    %s244 = scalar_lea.sflag [#allocation4], 1
    %245 = vsyncpa %s244, 1

</llo_original>
